<compile_context>
chip_gen: v6e
topology: v6e:2x2x1
jax: 0.10.0
libtpu: 0.0.40
codegen_flags: <defaults>
</compile_context>

<pallas_src>
import jax
import jax.numpy as jnp
from jax.experimental import pallas as pl
from jax.experimental.pallas import tpu as pltpu

H1 = 128  # fc1 width 64, zero-padded to lane width
H2 = 128  # fc2 width 32, zero-padded to lane width


def critic_kernel(x_ref, w1_ref, b1_ref, w2_ref, b2_ref, w3_ref, b3_ref, o_ref):
    # fc1 + ReLU : bf16 MXU matmul, f32 accumulation, f32 epilogue
    h1 = jnp.dot(x_ref[...], w1_ref[...], preferred_element_type=jnp.float32)
    h1 = jnp.maximum(h1 + b1_ref[...], 0.0)
    # fc2 + ReLU
    h2 = jnp.dot(h1.astype(jnp.bfloat16), w2_ref[...],
                 preferred_element_type=jnp.float32)
    h2 = jnp.maximum(h2 + b2_ref[...], 0.0)
    # fc3 (N=1): VPU multiply + lane reduction; MXU stays free for the next tile
    out = jnp.sum(h2 * w3_ref[...].astype(jnp.float32), axis=-1) + b3_ref[0, 0]
    # lane-dense store: batch lives along the lane axis
    o_ref[...] = out.reshape(1, 1, -1).astype(o_ref.dtype)


def _round_up(v, m):
    return ((v + m - 1) // m) * m


def critic_forward(x, params, *, tile_b=512):
    w1, b1, w2, b2, w3, b3 = params
    B, in_dim = x.shape
    h1_real, h2_real = w1.shape[1], w2.shape[1]

    # --- pad hidden widths to 128 lanes; cast matmul operands to bf16 ---
    w1p = jnp.zeros((in_dim, H1), jnp.bfloat16).at[:, :h1_real].set(w1.astype(jnp.bfloat16))
    b1p = jnp.zeros((1, H1), jnp.float32).at[:, :h1_real].set(b1)
    w2p = jnp.zeros((H1, H2), jnp.bfloat16).at[:h1_real, :h2_real].set(w2.astype(jnp.bfloat16))
    b2p = jnp.zeros((1, H2), jnp.float32).at[:, :h2_real].set(b2)
    w3p = jnp.zeros((1, H2), jnp.bfloat16).at[:, :h2_real].set(w3[:, 0].astype(jnp.bfloat16))
    b3s = jnp.asarray(b3, jnp.float32).reshape(1, 1)

    # --- batch tiling: TB multiple of 8, batch zero-padded to a multiple of TB ---
    tb = int(min(tile_b, _round_up(max(B, 1), 8)))
    tb = max(8, (tb // 8) * 8)
    b_pad = _round_up(B, tb)
    n_tiles = b_pad // tb
    x_pad = jnp.zeros((b_pad, in_dim), jnp.bfloat16).at[:B].set(x.astype(jnp.bfloat16))

    flops = 2 * b_pad * (in_dim * H1 + H1 * H2 + H2)
    bytes_accessed = (b_pad * in_dim * 2                        # x (bf16)
                      + (in_dim * H1 + H1 * H2 + H2) * 2        # weights (bf16)
                      + (H1 + H2 + 1) * 4                       # biases (f32)
                      + b_pad * 4)                              # output (f32)

    out = pl.pallas_call(
        critic_kernel,
        out_shape=jax.ShapeDtypeStruct((n_tiles, 1, tb), jnp.float32),
        grid=(n_tiles,),
        in_specs=[
            pl.BlockSpec((tb, in_dim), lambda i: (i, 0)),       # x tile (streamed)
            pl.BlockSpec((in_dim, H1), lambda i: (0, 0)),       # w1 (VMEM-resident)
            pl.BlockSpec((1, H1), lambda i: (0, 0)),            # b1
            pl.BlockSpec((H1, H2), lambda i: (0, 0)),           # w2
            pl.BlockSpec((1, H2), lambda i: (0, 0)),            # b2
            pl.BlockSpec((1, H2), lambda i: (0, 0)),            # w3 row
            pl.BlockSpec(memory_space=pltpu.MemorySpace.SMEM),  # b3 scalar
        ],
        out_specs=pl.BlockSpec((1, 1, tb), lambda i: (i, 0, 0)),
        compiler_params=pltpu.CompilerParams(
            dimension_semantics=("parallel",),    # shard batch axis across TCs (v7x)
            vmem_limit_bytes=32 * 1024 * 1024,    # explicit; safe on v5e/v6e/v7x
        ),
        cost_estimate=pl.CostEstimate(
            flops=flops, transcendentals=0, bytes_accessed=bytes_accessed),
    )(x_pad, w1p, b1p, w2p, b2p, w3p, b3s)

    # (n_tiles, 1, TB) lane-dense slab -> (B, 1)
    return out.reshape(b_pad)[:B].reshape(B, 1)


def init_params(key, input_size):
    """Deterministic init mimicking PyTorch Linear default (U[-1/sqrt(fan_in), +])."""
    def linear(k, fan_in, fan_out):
        kw, kb = jax.random.split(k)
        bound = 1.0 / jnp.sqrt(fan_in)
        w = jax.random.uniform(kw, (fan_in, fan_out), jnp.float32, -bound, bound)
        b = jax.random.uniform(kb, (1, fan_out), jnp.float32, -bound, bound)
        return w, b

    k1, k2, k3 = jax.random.split(key, 3)
    w1, b1 = linear(k1, input_size, 64)
    w2, b2 = linear(k2, 64, 32)
    w3, b3 = linear(k3, 32, 1)
    return w1, b1, w2, b2, w3, b3


if __name__ == "__main__":
    key = jax.random.PRNGKey(0)
    k_params, k_x = jax.random.split(key)

    batch, input_size = 8, 16
    params = init_params(k_params, input_size)
    x = jax.random.normal(k_x, (batch, input_size), jnp.float32)

    out = critic_forward(x, params)
    out = jax.block_until_ready(out)
    assert out.shape == (batch, 1)

    w1, b1, w2, b2, w3, b3 = params

    # Tight check: same bf16-operand / f32-accumulate computation in plain JAX.
    xb = x.astype(jnp.bfloat16)
    ref_q = jnp.maximum(
        jnp.dot(xb, w1.astype(jnp.bfloat16), preferred_element_type=jnp.float32) + b1, 0.0)
    ref_q = jnp.maximum(
        jnp.dot(ref_q.astype(jnp.bfloat16), w2.astype(jnp.bfloat16),
                preferred_element_type=jnp.float32) + b2, 0.0)
    ref_q = jnp.dot(ref_q, w3.astype(jnp.bfloat16).astype(jnp.float32)) + b3
    assert jnp.allclose(out, ref_q, atol=2e-3, rtol=2e-3), "mismatch vs bf16 reference"

    # Loose check: full-f32 reference (bf16 operand quantization tolerance).
    ref = jnp.maximum(x @ w1 + b1, 0.0)
    ref = jnp.maximum(ref @ w2 + b2, 0.0)
    ref = ref @ w3 + b3
    assert jnp.allclose(out, ref, atol=5e-2, rtol=5e-2), "mismatch vs f32 reference"

    print("KERNEL_OK")
</pallas_src>

<mosaic_0001>
module attributes {stable_mosaic.version = 11 : i64} {
  func.func @critic_kernel(%arg0: i32, %arg1: memref<8x16xbf16, #tpu.memory_space<vmem>>, %arg2: memref<16x128xbf16, #tpu.memory_space<vmem>>, %arg3: memref<1x128xf32, #tpu.memory_space<vmem>>, %arg4: memref<128x128xbf16, #tpu.memory_space<vmem>>, %arg5: memref<1x128xf32, #tpu.memory_space<vmem>>, %arg6: memref<1x128xbf16, #tpu.memory_space<vmem>>, %arg7: memref<1x1xf32, #tpu.memory_space<smem>>, %arg8: memref<1x1x8xf32, #tpu.memory_space<vmem>>) attributes {dimension_semantics = [#tpu.dimension_semantics<parallel>], iteration_bounds = array<i64: 1>, scalar_prefetch = 0 : i64, scratch_operands = 0 : i64, tpu.core_type = #tpu.core_type<tc>, window_params = [{transform_indices = @transform_0, window_bounds = array<i64: 8, 16>}, {pipeline_mode = #tpu.pipeline_mode<synchronous>, transform_indices = @transform_1, window_bounds = array<i64: 16, 128>}, {pipeline_mode = #tpu.pipeline_mode<synchronous>, transform_indices = @transform_2, window_bounds = array<i64: 1, 128>}, {pipeline_mode = #tpu.pipeline_mode<synchronous>, transform_indices = @transform_3, window_bounds = array<i64: 128, 128>}, {pipeline_mode = #tpu.pipeline_mode<synchronous>, transform_indices = @transform_4, window_bounds = array<i64: 1, 128>}, {pipeline_mode = #tpu.pipeline_mode<synchronous>, transform_indices = @transform_5, window_bounds = array<i64: 1, 128>}, {transform_indices = @transform_6, window_bounds = array<i64: 1, 1>}, {transform_indices = @transform_7, window_bounds = array<i64: 1, 1, 8>}]} {
    %c0 = arith.constant 0 : index
    %c0_0 = arith.constant 0 : index
    %0 = vector.load %arg1[%c0, %c0_0] : memref<8x16xbf16, #tpu.memory_space<vmem>>, vector<8x16xbf16>
    %c0_1 = arith.constant 0 : index
    %c0_2 = arith.constant 0 : index
    %1 = vector.load %arg2[%c0_1, %c0_2] : memref<16x128xbf16, #tpu.memory_space<vmem>>, vector<16x128xbf16>
    %cst = arith.constant dense<0.000000e+00> : vector<8x128xf32>
    %2 = tpu.matmul %0, %1, %cst {dimension_numbers = #tpu.dot_dimension_numbers<[1], [0], [0], [1], [0, 0, 1, 1], [], []>} : vector<8x16xbf16>, vector<16x128xbf16>, vector<8x128xf32> -> vector<8x128xf32>
    %c0_3 = arith.constant 0 : index
    %c0_4 = arith.constant 0 : index
    %3 = vector.load %arg3[%c0_3, %c0_4] : memref<1x128xf32, #tpu.memory_space<vmem>>, vector<1x128xf32>
    %4 = vector.broadcast %3 : vector<1x128xf32> to vector<8x128xf32>
    %5 = arith.addf %2, %4 : vector<8x128xf32>
    %cst_5 = arith.constant 0.000000e+00 : f32
    %6 = vector.broadcast %cst_5 : f32 to vector<8x128xf32>
    %7 = arith.maximumf %5, %6 : vector<8x128xf32>
    %8 = arith.truncf %7 : vector<8x128xf32> to vector<8x128xbf16>
    %c0_6 = arith.constant 0 : index
    %c0_7 = arith.constant 0 : index
    %9 = vector.load %arg4[%c0_6, %c0_7] : memref<128x128xbf16, #tpu.memory_space<vmem>>, vector<128x128xbf16>
    %cst_8 = arith.constant dense<0.000000e+00> : vector<8x128xf32>
    %10 = tpu.matmul %8, %9, %cst_8 {dimension_numbers = #tpu.dot_dimension_numbers<[1], [0], [0], [1], [0, 0, 1, 1], [], []>} : vector<8x128xbf16>, vector<128x128xbf16>, vector<8x128xf32> -> vector<8x128xf32>
    %c0_9 = arith.constant 0 : index
    %c0_10 = arith.constant 0 : index
    %11 = vector.load %arg5[%c0_9, %c0_10] : memref<1x128xf32, #tpu.memory_space<vmem>>, vector<1x128xf32>
    %12 = vector.broadcast %11 : vector<1x128xf32> to vector<8x128xf32>
    %13 = arith.addf %10, %12 : vector<8x128xf32>
    %cst_11 = arith.constant 0.000000e+00 : f32
    %14 = vector.broadcast %cst_11 : f32 to vector<8x128xf32>
    %15 = arith.maximumf %13, %14 : vector<8x128xf32>
    %c0_12 = arith.constant 0 : index
    %c0_13 = arith.constant 0 : index
    %16 = vector.load %arg6[%c0_12, %c0_13] : memref<1x128xbf16, #tpu.memory_space<vmem>>, vector<1x128xbf16>
    %17 = arith.extf %16 : vector<1x128xbf16> to vector<1x128xf32>
    %18 = vector.broadcast %17 : vector<1x128xf32> to vector<8x128xf32>
    %19 = arith.mulf %15, %18 : vector<8x128xf32>
    %cst_14 = arith.constant dense<0.000000e+00> : vector<8xf32>
    %20 = vector.multi_reduction <add>, %19, %cst_14 [1] : vector<8x128xf32> to vector<8xf32>
    %c0_15 = arith.constant 0 : index
    %c0_16 = arith.constant 0 : index
    %21 = memref.load %arg7[%c0_15, %c0_16] : memref<1x1xf32, #tpu.memory_space<smem>>
    %22 = vector.broadcast %21 : f32 to vector<8xf32>
    %23 = arith.addf %20, %22 : vector<8xf32>
    %24 = vector.shape_cast %23 : vector<8xf32> to vector<1x1x8xf32>
    %c0_17 = arith.constant 0 : index
    %c0_18 = arith.constant 0 : index
    %c0_19 = arith.constant 0 : index
    %25 = vector.load %arg8[%c0_17, %c0_18, %c0_19] : memref<1x1x8xf32, #tpu.memory_space<vmem>>, vector<1x1x8xf32>
    tpu.vector_store %arg8[%c0_17, %c0_18, %c0_19], %24 {strides = array<i32>} : memref<1x1x8xf32, #tpu.memory_space<vmem>>, vector<1x1x8xf32>,
    return
  }
  func.func @transform_0(%arg0: i32) -> (i32, i32) {
    %c0_i32 = arith.constant 0 : i32
    %c0_i32_0 = arith.constant 0 : i32
    return %arg0, %c0_i32 : i32, i32
  }
  func.func @transform_1(%arg0: i32) -> (i32, i32) {
    %c0_i32 = arith.constant 0 : i32
    %c0_i32_0 = arith.constant 0 : i32
    %c0_i32_1 = arith.constant 0 : i32
    return %c0_i32, %c0_i32_0 : i32, i32
  }
  func.func @transform_2(%arg0: i32) -> (i32, i32) {
    %c0_i32 = arith.constant 0 : i32
    %c0_i32_0 = arith.constant 0 : i32
    %c0_i32_1 = arith.constant 0 : i32
    return %c0_i32, %c0_i32_0 : i32, i32
  }
  func.func @transform_3(%arg0: i32) -> (i32, i32) {
    %c0_i32 = arith.constant 0 : i32
    %c0_i32_0 = arith.constant 0 : i32
    %c0_i32_1 = arith.constant 0 : i32
    return %c0_i32, %c0_i32_0 : i32, i32
  }
  func.func @transform_4(%arg0: i32) -> (i32, i32) {
    %c0_i32 = arith.constant 0 : i32
    %c0_i32_0 = arith.constant 0 : i32
    %c0_i32_1 = arith.constant 0 : i32
    return %c0_i32, %c0_i32_0 : i32, i32
  }
  func.func @transform_5(%arg0: i32) -> (i32, i32) {
    %c0_i32 = arith.constant 0 : i32
    %c0_i32_0 = arith.constant 0 : i32
    %c0_i32_1 = arith.constant 0 : i32
    return %c0_i32, %c0_i32_0 : i32, i32
  }
  func.func @transform_6(%arg0: i32) -> (i32, i32) {
    %c0_i32 = arith.constant 0 : i32
    %c0_i32_0 = arith.constant 0 : i32
    %c0_i32_1 = arith.constant 0 : i32
    return %c0_i32, %c0_i32_0 : i32, i32
  }
  func.func @transform_7(%arg0: i32) -> (i32, i32, i32) {
    %c0_i32 = arith.constant 0 : i32
    %c0_i32_0 = arith.constant 0 : i32
    %c0_i32_1 = arith.constant 0 : i32
    return %arg0, %c0_i32, %c0_i32_0 : i32, i32, i32
  }
}

</mosaic_0001>

<llo_original>
// kernel: tpu_custom_call.1
$region0: #{tpu_custom_call.1}
  #allocation0 [shape = 'u32[]', space=smem, size = 0x4, offset = 0x4, fixed_abs, tag = 'smem constant byte address 0x4 - core index']
  #allocation1 [shape = 'u32[144,128]{1,0:T(1,128)}', space=vmem, size = 0x12000, scoped, tag = 'internal scratch']
  #allocation2 [shape = 'f32[1,1]{1,0:T(1,128)S(6)}', space=smem, size = 0x200, scoped, tag = 'scoped memory for tpu_custom_call.1']
  %s0 = inlined_call_operand.hbm [shape: bf16[8,16], index: 0, kind: input, shape index: {}]
  %s1 = inlined_call_operand.hbm [shape: bf16[16,128], index: 1, kind: input, shape index: {}]
  %s2 = inlined_call_operand.vmem [shape: f32[1,128], index: 2, kind: input, shape index: {}]
  %s3 = inlined_call_operand.hbm [shape: bf16[128,128], index: 3, kind: input, shape index: {}]
  %s4 = inlined_call_operand.vmem [shape: f32[1,128], index: 4, kind: input, shape index: {}]
  %s5 = inlined_call_operand.vmem [shape: bf16[1,128], index: 5, kind: input, shape index: {}]
  %s6 = inlined_call_operand.<no memory space> [shape: f32[1,1], index: 6, kind: input, shape index: {}]
  %s7 = inlined_call_operand.hbm [shape: f32[1,1,8], index: 7, kind: output, shape index: {}]
  %s8 = sld [smem:[#allocation0]]
  $region50: #{tpu_custom_call.1} parent=0
    _
  %s10 = ssub.s32 1, %s8
  %s11 = scalar_select 0, %s10, %s8
  %12 = sst [smem:[#allocation2]] %s6
  $region1: #{tpu_custom_call.1} parent=0
    #allocation3 [shape = 'u8[2048]{0}', space=vmem, size = 0x800, scoped, tag = 'input window, operand 0, single buffered']
    #allocation4 [shape = 's32[1]{0}', space=sflag, size = 0x4, scoped, tag = 'scoped memory for tpu_custom_call.1']
    #allocation5 [shape = 's32[1]{0}', space=sflag, size = 0x4, scoped, tag = 'scoped memory for tpu_custom_call.1']
    #allocation6 [shape = 'u8[4096]{0}', space=vmem, size = 0x1000, scoped, tag = 'input window, operand 1, single buffered']
    #allocation7 [shape = 's32[1]{0}', space=sflag, size = 0x4, scoped, tag = 'scoped memory for tpu_custom_call.1']
    #allocation8 [shape = 'u8[32768]{0}', space=vmem, size = 0x8000, scoped, tag = 'input window, operand 3, single buffered']
    #allocation9 [shape = 'u8[512]{0}', space=vmem, size = 0x400, scoped, tag = 'output window, operand 0, single buffered']
    %13 = vsyncpa [#allocation4], 0
    %14 = vsyncpa [#allocation7], 0
    %15 = vsyncpa [#allocation5], 0
    // Predicated region
    $region2: #{tpu_custom_call.1} parent=1 // pred_check
      _
    $region3: #{tpu_custom_call.1} parent=1 // pred_check_branch
      %17 = sbr.rel (0) target = $region5
    $region4: #{tpu_custom_call.1} parent=1 // pred_region
      %s19 = ssub.s32 64, 64
      %20 = vsyncadd [#allocation4], %s19
      %s22 = sshll.u32 [#allocation3], 4
      %s23 = int_to_ptr.vmem [resolvable:$true] %s22
      %25 = dma.hbm_to_vmem [thread:$0]  %s0, 64, %s23, [#allocation4]
    $region5: #{tpu_custom_call.1} parent=1 // pred_fallthru
      _
    // Predicated region
    $region6: #{tpu_custom_call.1} parent=1 // pred_check
      _
    $region7: #{tpu_custom_call.1} parent=1 // pred_check_branch
      %27 = sbr.rel (0) target = $region9
    $region8: #{tpu_custom_call.1} parent=1 // pred_region
      %s29 = ssub.s32 128, 128
      %30 = vsyncadd [#allocation7], %s29
      %s31 = sshll.u32 [#allocation6], 4
      %s32 = int_to_ptr.vmem [resolvable:$true] %s31
      %37 = dma.hbm_to_vmem [thread:$0]  %s1, 128, %s32, [#allocation7], 64, 64, 4
    $region9: #{tpu_custom_call.1} parent=1 // pred_fallthru
      _
    // Predicated region
    $region10: #{tpu_custom_call.1} parent=1 // pred_check
      _
    $region11: #{tpu_custom_call.1} parent=1 // pred_check_branch
      %39 = sbr.rel (0) target = $region13
    $region12: #{tpu_custom_call.1} parent=1 // pred_region
      _
    $region13: #{tpu_custom_call.1} parent=1 // pred_fallthru
      _
    // Predicated region
    $region14: #{tpu_custom_call.1} parent=1 // pred_check
      _
    $region15: #{tpu_custom_call.1} parent=1 // pred_check_branch
      %41 = sbr.rel (0) target = $region17
    $region16: #{tpu_custom_call.1} parent=1 // pred_region
      %s43 = ssub.s32 1024, 1024
      %44 = vsyncadd [#allocation7], %s43
      %s45 = sshll.u32 [#allocation8], 4
      %s46 = int_to_ptr.vmem [resolvable:$true] %s45
      %51 = dma.hbm_to_vmem [thread:$0]  %s3, 1024, %s46, [#allocation7], 64, 64, 4
    $region17: #{tpu_custom_call.1} parent=1 // pred_fallthru
      _
    // Predicated region
    $region18: #{tpu_custom_call.1} parent=1 // pred_check
      _
    $region19: #{tpu_custom_call.1} parent=1 // pred_check_branch
      %53 = sbr.rel (0) target = $region21
    $region20: #{tpu_custom_call.1} parent=1 // pred_region
      _
    $region21: #{tpu_custom_call.1} parent=1 // pred_fallthru
      _
    // Predicated region
    $region22: #{tpu_custom_call.1} parent=1 // pred_check
      _
    $region23: #{tpu_custom_call.1} parent=1 // pred_check_branch
      %55 = sbr.rel (0) target = $region25
    $region24: #{tpu_custom_call.1} parent=1 // pred_region
      _
    $region25: #{tpu_custom_call.1} parent=1 // pred_fallthru
      _
    // Predicated region
    $region26: #{tpu_custom_call.1} parent=1 // pred_check
      _
    $region27: #{tpu_custom_call.1} parent=1 // pred_check_branch
      %57 = sbr.rel (0) target = $region29
    $region28: #{tpu_custom_call.1} parent=1 // pred_region
      _
    $region29: #{tpu_custom_call.1} parent=1 // pred_fallthru
      _
    // Predicated region
    $region30: #{tpu_custom_call.1} parent=1 // pred_check
      _
    $region31: #{tpu_custom_call.1} parent=1 // pred_check_branch
      %59 = sbr.rel (0) target = $region33
    $region32: #{tpu_custom_call.1} parent=1 // pred_region
      %60 = dma.done [#allocation4], 64
    $region33: #{tpu_custom_call.1} parent=1 // pred_fallthru
      _
    // Predicated region
    $region34: #{tpu_custom_call.1} parent=1 // pred_check
      _
    $region35: #{tpu_custom_call.1} parent=1 // pred_check_branch
      %62 = sbr.rel (0) target = $region37
    $region36: #{tpu_custom_call.1} parent=1 // pred_region
      %63 = dma.done [#allocation7], 128
    $region37: #{tpu_custom_call.1} parent=1 // pred_fallthru
      _
    // Predicated region
    $region38: #{tpu_custom_call.1} parent=1 // pred_check
      _
    $region39: #{tpu_custom_call.1} parent=1 // pred_check_branch
      %65 = sbr.rel (0) target = $region41
    $region40: #{tpu_custom_call.1} parent=1 // pred_region
      %66 = dma.done [#allocation7], 1024
    $region41: #{tpu_custom_call.1} parent=1 // pred_fallthru
      _
    %v68 = vld [vmem:[#allocation3] sm:$0xf]
    %v69 = vld [vmem:[#allocation6] sm:$0xf]
    %v70 = vld [vmem:[#allocation6 + $0x4] sm:$0xf]
    %v71 = vld [vmem:[%s2] sm:$0x1]
    %v73 = vlaneseq
    %v74 = vshrl.u32 %v73, 7
    %v75 = vsub.s32 0, %v74
    %v76 = vrot.slane %v71, %v75
    %v80 = vunpack.c.l.b16 %v69
    %v81 = vunpack.c.l.b16 %v70
    %v82 = vpack.c.b16 %v81, %v80
    %vm84 = vcmask 130048
    %v86 = vsel %vm84, %v68, 0
    %88 = vmatprep.subr.bf16.mxu0 0
    %89 = vmatpush1.bf16.msra.mxu0 0
    %90 = vmatprep.subr.bf16.mxu0 0
    %91 = vmatpush1.bf16.msra.mxu0 0
    %92 = vmatprep.subr.bf16.mxu0 0
    %93 = vmatpush1.bf16.msra.mxu0 0
    %94 = vmatprep.subr.bf16.mxu0 0
    %95 = vmatpush1.bf16.msra.mxu0 0
    %96 = vmatprep.subr.bf16.mxu0 0
    %97 = vmatpush1.bf16.msra.mxu0 0
    %98 = vmatprep.subr.bf16.mxu0 0
    %99 = vmatpush1.bf16.msra.mxu0 0
    %100 = vmatprep.subr.bf16.mxu0 0
    %101 = vmatpush1.bf16.msra.mxu0 0
    %102 = vmatprep.subr.bf16.mxu0 0
    %103 = vmatpush1.bf16.msra.mxu0 %v82
    %104 = vmatprep.subr.bf16.mxu0 0
    %105 = vmatpush2.bf16.msra.mxu0 0
    %106 = vmatprep.subr.bf16.mxu0 0
    %107 = vmatpush2.bf16.msra.mxu0 0
    %108 = vmatprep.subr.bf16.mxu0 0
    %109 = vmatpush2.bf16.msra.mxu0 0
    %110 = vmatprep.subr.bf16.mxu0 0
    %111 = vmatpush2.bf16.msra.mxu0 0
    %112 = vmatprep.subr.bf16.mxu0 0
    %113 = vmatpush2.bf16.msra.mxu0 0
    %114 = vmatprep.subr.bf16.mxu0 0
    %115 = vmatpush2.bf16.msra.mxu0 0
    %116 = vmatprep.subr.bf16.mxu0 0
    %117 = vmatpush2.bf16.msra.mxu0 0
    %118 = vmatprep.subr.bf16.mxu0 0
    %119 = vmatpush2.bf16.msra.mxu0 0
    %120 = vmatprep.mubr.bf16.mxu0 0
    %121 = vmatmul.mubr.bf16.gmra.mxu0 %v86
    %v122 = vpop.f32.mrf.mxu0
    %v123 = vadd.f32 %v76, %v122
    %v124 = vpop.f32.mrf.mxu0
    %v125 = vpop.f32.mrf.mxu0
    %v126 = vpop.f32.mrf.mxu0
    %127 = vdwg.mxu0
    %v128 = vmax.f32 %v123, 0.0
    %v129 = vpack.c.bf16 %v128, %v128
    %v130 = vld [vmem:[#allocation8] sm:$0xf]
    %v131 = vld [vmem:[#allocation8 + $0x4] sm:$0xf]
    %v132 = vld [vmem:[#allocation8 + $0x8] sm:$0xf]
    %v133 = vld [vmem:[#allocation8 + $0xc] sm:$0xf]
    %v134 = vld [vmem:[#allocation8 + $0x10] sm:$0xf]
    %v135 = vld [vmem:[#allocation8 + $0x14] sm:$0xf]
    %v136 = vld [vmem:[#allocation8 + $0x18] sm:$0xf]
    %v137 = vld [vmem:[#allocation8 + $0x1c] sm:$0xf]
    %v138 = vld [vmem:[#allocation8 + $0x20] sm:$0xf]
    %v139 = vld [vmem:[#allocation8 + $0x24] sm:$0xf]
    %v140 = vld [vmem:[#allocation8 + $0x28] sm:$0xf]
    %v141 = vld [vmem:[#allocation8 + $0x2c] sm:$0xf]
    %v142 = vld [vmem:[#allocation8 + $0x30] sm:$0xf]
    %v143 = vld [vmem:[#allocation8 + $0x34] sm:$0xf]
    %v144 = vld [vmem:[#allocation8 + $0x38] sm:$0xf]
    %v145 = vld [vmem:[#allocation8 + $0x3c] sm:$0xf]
    %v146 = vld [vmem:[%s4] sm:$0x1]
    %v148 = vlaneseq
    %v149 = vshrl.u32 %v148, 7
    %v150 = vsub.s32 0, %v149
    %v151 = vrot.slane %v146, %v150
    %v169 = vunpack.c.l.b16 %v130
    %v170 = vunpack.c.l.b16 %v131
    %v171 = vunpack.c.l.b16 %v132
    %v172 = vunpack.c.l.b16 %v133
    %v173 = vunpack.c.l.b16 %v134
    %v174 = vunpack.c.l.b16 %v135
    %v175 = vunpack.c.l.b16 %v136
    %v176 = vunpack.c.l.b16 %v137
    %v177 = vunpack.c.l.b16 %v138
    %v178 = vunpack.c.l.b16 %v139
    %v179 = vunpack.c.l.b16 %v140
    %v180 = vunpack.c.l.b16 %v141
    %v181 = vunpack.c.l.b16 %v142
    %v182 = vunpack.c.l.b16 %v143
    %v183 = vunpack.c.l.b16 %v144
    %v184 = vunpack.c.l.b16 %v145
    %v185 = vpack.c.b16 %v170, %v169
    %v186 = vpack.c.b16 %v172, %v171
    %v187 = vpack.c.b16 %v174, %v173
    %v188 = vpack.c.b16 %v176, %v175
    %v189 = vpack.c.b16 %v178, %v177
    %v190 = vpack.c.b16 %v180, %v179
    %v191 = vpack.c.b16 %v182, %v181
    %v192 = vpack.c.b16 %v184, %v183
    %201 = vmatprep.subr.bf16.mxu0 0
    %202 = vmatpush1.bf16.msra.mxu0 %v192
    %203 = vmatprep.subr.bf16.mxu0 0
    %204 = vmatpush1.bf16.msra.mxu0 %v191
    %205 = vmatprep.subr.bf16.mxu0 0
    %206 = vmatpush1.bf16.msra.mxu0 %v190
    %207 = vmatprep.subr.bf16.mxu0 0
    %208 = vmatpush1.bf16.msra.mxu0 %v189
    %209 = vmatprep.subr.bf16.mxu0 0
    %210 = vmatpush1.bf16.msra.mxu0 %v188
    %211 = vmatprep.subr.bf16.mxu0 0
    %212 = vmatpush1.bf16.msra.mxu0 %v187
    %213 = vmatprep.subr.bf16.mxu0 0
    %214 = vmatpush1.bf16.msra.mxu0 %v186
    %215 = vmatprep.subr.bf16.mxu0 0
    %216 = vmatpush1.bf16.msra.mxu0 %v185
    %217 = vmatprep.subr.bf16.mxu0 0
    %218 = vmatpush2.bf16.msra.mxu0 0
    %219 = vmatprep.subr.bf16.mxu0 0
    %220 = vmatpush2.bf16.msra.mxu0 0
    %221 = vmatprep.subr.bf16.mxu0 0
    %222 = vmatpush2.bf16.msra.mxu0 0
    %223 = vmatprep.subr.bf16.mxu0 0
    %224 = vmatpush2.bf16.msra.mxu0 0
    %225 = vmatprep.subr.bf16.mxu0 0
    %226 = vmatpush2.bf16.msra.mxu0 0
    %227 = vmatprep.subr.bf16.mxu0 0
    %228 = vmatpush2.bf16.msra.mxu0 0
    %229 = vmatprep.subr.bf16.mxu0 0
    %230 = vmatpush2.bf16.msra.mxu0 0
    %231 = vmatprep.subr.bf16.mxu0 0
    %232 = vmatpush2.bf16.msra.mxu0 0
    %233 = vmatprep.mubr.bf16.mxu0 0
    %234 = vmatmul.mubr.bf16.gmra.mxu0 %v129
    %v235 = vpop.f32.mrf.mxu0
    %v236 = vadd.f32 %v151, %v235
    %v237 = vpop.f32.mrf.mxu0
    %v238 = vpop.f32.mrf.mxu0
    %v239 = vpop.f32.mrf.mxu0
    %240 = vdwg.mxu0
    %v241 = vmax.f32 %v236, 0.0
    %v242 = vld [vmem:[%s5] sm:$0x1]
    %v243 = vunpack.c.l.bf16 %v242
    %v244 = vlaneseq
    %v245 = vshrl.u32 %v244, 7
    %v246 = vsub.s32 0, %v245
    %v247 = vrot.slane %v243, %v246
    %v248 = vmul.f32 %v241, %v247
    %249 = vadd.xlane.f32.xlu0 %v248
    %v250 = vpop.xlane.xlu0 %249
    %s251 = sld [smem:[#allocation2]]
    %v252 = vstv %s251
    %v253 = vadd.f32 %v250, %v252
    %v255 = vlaneseq
    %v256 = vand.u32 %v255, 127
    %v257 = vlaneseq
    %v258 = vshrl.u32 %v257, 7
    %v259 = vsub.s32 %v256, %v258
    %v260 = vrot.slane %v253, %v259
    %vm262 = vcmask 57344
    %263 = vst.msk [vmem:[#allocation9] sm:$0x1] %vm262, %v260
    // Predicated region
    $region42: #{tpu_custom_call.1} parent=1 // pred_check
      _
    $region43: #{tpu_custom_call.1} parent=1 // pred_check_branch
      %265 = sbr.rel (0) target = $region45
    $region44: #{tpu_custom_call.1} parent=1 // pred_region
      %s267 = ssub.s32 16, 16
      %268 = vsyncadd [#allocation5], %s267
      %s270 = sshll.u32 [#allocation9], 4
      %s271 = int_to_ptr.vmem [resolvable:$true] %s270
      %273 = dma.vmem_to_hbm [thread:$0]  %s271, 16, %s7, [#allocation5]
    $region45: #{tpu_custom_call.1} parent=1 // pred_fallthru
      _
    // Predicated region
    $region46: #{tpu_custom_call.1} parent=1 // pred_check
      _
    $region47: #{tpu_custom_call.1} parent=1 // pred_check_branch
      %275 = sbr.rel (0) target = $region49
    $region48: #{tpu_custom_call.1} parent=1 // pred_region
      %276 = dma.done [#allocation5], 16
    $region49: #{tpu_custom_call.1} parent=1 // pred_fallthru
      _
    %277 = vsyncpa [#allocation4], 1
    %278 = vsyncpa [#allocation7], 1
    %279 = vsyncpa [#allocation5], 1

</llo_original>
